<compile_context>
chip_gen: v7x
topology: tpu7x:2x2x1
jax: 0.10.0
libtpu: 0.0.40
codegen_flags: <defaults>
</compile_context>

<pallas_src>
import math
import functools

import jax
import jax.numpy as jnp
from jax import lax
from jax.experimental import pallas as pl
from jax.experimental.pallas import tpu as pltpu


def _round_up(a, b):
    return (a + b - 1) // b * b


def _l2_normalize(v, eps=1e-12):
    """x / max(||x||_2, eps) == x * rsqrt(max(sum x^2, eps^2))  (F.normalize)."""
    v = v.astype(jnp.float32)
    return v * lax.rsqrt(jnp.maximum(jnp.sum(v * v, axis=-1, keepdims=True), eps * eps))


def _aam_kernel(x_ref, w_ref, label_ref, loss_ref, corr_ref,
                m_s, l_s, tgt_s, bv_s, bi_s,
                *, cos_m, sin_m, th, mm, s, n_class, tn, n_pad):
    j = pl.program_id(1)
    nj = pl.num_programs(1)

    lab = label_ref[...]                                       # (TB, 1) int32

    # ---- per-batch-tile init on the first class tile: reset online-softmax state
    @pl.when(j == 0)
    def _init():
        m_s[...] = jnp.full_like(m_s, -jnp.inf)                # running max
        l_s[...] = jnp.zeros_like(l_s)                         # running exp-sum
        tgt_s[...] = jnp.zeros_like(tgt_s)                     # target logit
        bv_s[...] = jnp.full_like(bv_s, -jnp.inf)              # running best logit
        bi_s[...] = jnp.zeros_like(bi_s)                       # running argmax

    # ---- scaled cosine tile on the MXU: bf16 (TB,C) @ bf16 (C,TN) -> f32.
    #      x is pre-normalized, w is pre-normalized * s and pre-transposed,
    #      so cos_s == s * cosine and no transpose / scale happens in-kernel.
    cos_s = jnp.dot(x_ref[...], w_ref[...],
                    preferred_element_type=jnp.float32)        # (TB, TN)

    # ---- local tile coordinates only (no full-tile global-index add)
    local_col = lax.broadcasted_iota(jnp.int32, cos_s.shape, 1)   # (TB, TN)
    local_lab = lab - j * tn                                      # (TB, 1)
    one_hot = local_col == local_lab                              # (TB, TN) bool
    in_tile = (local_lab >= 0) & (local_lab < tn)                 # (TB, 1)  bool

    # ---- additive angular margin only on the target column ((TB,1) math)
    tgt_cos_s = jnp.sum(jnp.where(one_hot, cos_s, 0.0),
                        axis=-1, keepdims=True)                   # (TB, 1)
    tgt_cos = tgt_cos_s * (1.0 / s)
    sine = jnp.sqrt(jnp.clip(1.0 - tgt_cos * tgt_cos, 0.0, 1.0))
    phi = tgt_cos * cos_m - sine * sin_m
    phi = jnp.where(tgt_cos - th > 0, phi, tgt_cos - mm)
    phi_s = phi * s                                               # (TB, 1)

    output = jnp.where(one_hot, phi_s, cos_s)                     # (TB, TN)
    if n_pad != n_class:
        # Padded class columns only exist in the last tile; for earlier tiles the
        # compare is all-true. Skipped entirely when n_class is a multiple of tn.
        output = jnp.where(local_col < (n_class - j * tn), output, -1e30)

    # ---- online softmax update (running max / running sum)
    tile_max = jnp.max(output, axis=-1, keepdims=True)            # (TB, 1)
    m_prev = m_s[...]
    m_new = jnp.maximum(m_prev, tile_max)
    l_s[...] = l_s[...] * jnp.exp(m_prev - m_new) + \
        jnp.sum(jnp.exp(output - m_new), axis=-1, keepdims=True)
    m_s[...] = m_new

    # ---- target-logit accumulation: per-row scalar math only
    tgt_s[...] += jnp.where(in_tile, phi_s, 0.0)

    # ---- running top-1 (first-occurrence tie-break: tiles visited in order,
    #      strict '>' across tiles, min-index within a tile)
    local_arg = jnp.min(jnp.where(output >= tile_max, local_col, jnp.int32(2 ** 30)),
                        axis=-1, keepdims=True)                   # (TB, 1)
    take = tile_max > bv_s[...]
    bi_s[...] = jnp.where(take, local_arg + j * tn, bi_s[...])
    bv_s[...] = jnp.maximum(bv_s[...], tile_max)

    # ---- finalize on the last class tile: per-row CE loss and correct flag
    @pl.when(j == nj - 1)
    def _fin():
        loss_ref[...] = (m_s[...] + jnp.log(l_s[...])) - tgt_s[...]
        corr_ref[...] = (bi_s[...] == lab).astype(jnp.float32)


def aam_softmax_loss(x, weight, label, *, m, s,
                     block_b=512, block_n=1024,
                     matmul_dtype=jnp.bfloat16,
                     weight_buffers=2,
                     vmem_limit_bytes=40 * 1024 * 1024):
    """Pallas forward of AAMsoftmax. Returns (loss, prec1) as float32 scalars.

    block_b: batch tile (multiple of 16). Bigger amortizes the weight stream;
             on v7x pick ~half the per-device batch so >= 2 tiles feed both TCs.
    block_n: class tile (multiple of 128). Raise (2048+) / raise weight_buffers
             (e.g. 3) if the weight DMA is still exposed, VMEM permitting.
    """
    B, C = x.shape
    n_class = weight.shape[0]

    tb = _round_up(min(block_b, _round_up(B, 16)), 16)
    tn = _round_up(min(block_n, _round_up(n_class, 128)), 128)
    b_pad = _round_up(B, tb)
    n_pad = _round_up(n_class, tn)

    # Hoisted (once-per-call) work: L2-normalize both operands in f32, fold the
    # scale s into the weight, cast to bf16, and pre-transpose the weight so the
    # kernel does a plain (M,K)@(K,N) contraction with a lane-dense class axis.
    wn = (_l2_normalize(weight) * float(s)).astype(matmul_dtype)      # (n_class, C)
    w_t = jnp.pad(wn, ((0, n_pad - n_class), (0, 0))).T               # (C, n_pad)
    xn = _l2_normalize(x).astype(matmul_dtype)                        # (B, C)
    x_p = jnp.pad(xn, ((0, b_pad - B), (0, 0)))                       # (b_pad, C)
    lab_p = jnp.pad(label.astype(jnp.int32), (0, b_pad - B)).reshape(b_pad, 1)

    kernel = functools.partial(
        _aam_kernel,
        cos_m=math.cos(m), sin_m=math.sin(m),
        th=math.cos(math.pi - m), mm=math.sin(math.pi - m) * m,
        s=float(s), n_class=n_class, tn=tn, n_pad=n_pad)

    # Weight tile streams along the innermost ("arbitrary") class axis. Optional
    # deeper buffering (weight_buffers=3) helps hide the weight DMA on v5e.
    w_spec_kwargs = {}
    if weight_buffers != 2:
        w_spec_kwargs["pipeline_mode"] = pl.Buffered(weight_buffers)
    w_spec = pl.BlockSpec((C, tn), lambda i, j: (0, j), **w_spec_kwargs)

    grid = (b_pad // tb, n_pad // tn)

    loss_rows, correct_rows = pl.pallas_call(
        kernel,
        out_shape=(jax.ShapeDtypeStruct((b_pad, 1), jnp.float32),
                   jax.ShapeDtypeStruct((b_pad, 1), jnp.float32)),
        grid_spec=pltpu.PrefetchScalarGridSpec(
            num_scalar_prefetch=0,
            grid=grid,
            in_specs=[
                pl.BlockSpec((tb, C), lambda i, j: (i, 0)),   # normalized x (bf16)
                w_spec,                                       # normalized, scaled w^T
                pl.BlockSpec((tb, 1), lambda i, j: (i, 0)),   # labels
            ],
            out_specs=[
                pl.BlockSpec((tb, 1), lambda i, j: (i, 0)),
                pl.BlockSpec((tb, 1), lambda i, j: (i, 0)),
            ],
            scratch_shapes=[
                pltpu.VMEM((tb, 1), jnp.float32),     # running max  m
                pltpu.VMEM((tb, 1), jnp.float32),     # running sum  l
                pltpu.VMEM((tb, 1), jnp.float32),     # target logit
                pltpu.VMEM((tb, 1), jnp.float32),     # running best logit
                pltpu.VMEM((tb, 1), jnp.int32),       # running argmax index
            ]),
        compiler_params=pltpu.CompilerParams(
            dimension_semantics=("parallel", "arbitrary"),
            vmem_limit_bytes=vmem_limit_bytes),
    )(x_p, w_t, lab_p)

    loss = jnp.sum(loss_rows[:B, 0]) / B
    prec1 = jnp.sum(correct_rows[:B, 0]) * (100.0 / B)
    return loss, prec1


def _reference_f32(x, weight, label, *, m, s):
    """Pure-JAX f32 reference matching the torch module exactly."""
    eps = 1e-12
    xn = x / jnp.maximum(jnp.linalg.norm(x, axis=-1, keepdims=True), eps)
    wn = weight / jnp.maximum(jnp.linalg.norm(weight, axis=-1, keepdims=True), eps)
    cosine = xn @ wn.T
    sine = jnp.sqrt(jnp.clip(1.0 - cosine * cosine, 0.0, 1.0))
    phi = cosine * math.cos(m) - sine * math.sin(m)
    phi = jnp.where(cosine - math.cos(math.pi - m) > 0,
                    phi, cosine - math.sin(math.pi - m) * m)
    one_hot = jax.nn.one_hot(label, cosine.shape[1], dtype=cosine.dtype)
    output = (one_hot * phi + (1.0 - one_hot) * cosine) * s
    logp = jax.nn.log_softmax(output, axis=-1)
    loss = -jnp.mean(jnp.take_along_axis(logp, label[:, None], axis=1))
    pred = jnp.argmax(output, axis=-1)
    prec1 = jnp.mean((pred == label).astype(jnp.float32)) * 100.0
    return loss, prec1


def _reference_matched(x, weight, label, *, m, s, matmul_dtype):
    """Reference using the kernel's numerics (f32 rsqrt-normalize, s folded into
    the bf16 weight before the matmul, margin applied to the target column only)."""
    xn = _l2_normalize(x).astype(matmul_dtype)
    wn = (_l2_normalize(weight) * float(s)).astype(matmul_dtype)
    cos_s = jnp.dot(xn, wn.T, preferred_element_type=jnp.float32)     # = s * cosine
    tgt_cos = jnp.take_along_axis(cos_s, label[:, None], axis=1) * (1.0 / s)
    sine = jnp.sqrt(jnp.clip(1.0 - tgt_cos * tgt_cos, 0.0, 1.0))
    phi = tgt_cos * math.cos(m) - sine * math.sin(m)
    phi = jnp.where(tgt_cos - math.cos(math.pi - m) > 0,
                    phi, tgt_cos - math.sin(math.pi - m) * m)
    one_hot = jnp.arange(cos_s.shape[1])[None, :] == label[:, None]
    output = jnp.where(one_hot, phi * s, cos_s)
    logp = jax.nn.log_softmax(output, axis=-1)
    loss = -jnp.mean(jnp.take_along_axis(logp, label[:, None], axis=1))
    pred = jnp.argmax(output, axis=-1)
    prec1 = jnp.mean((pred == label).astype(jnp.float32)) * 100.0
    return loss, prec1


if __name__ == "__main__":
    # Small synthetic problem exercising every code path:
    #   batch=24 -> tb=16 -> 2 batch tiles (parallel axis) + batch padding,
    #   n_class=300 -> tn=128 -> 3 class tiles (online softmax) + class padding,
    #   feature dim c=32.
    B, C, N_CLASS = 24, 32, 300
    M, S = 0.2, 30.0

    key = jax.random.PRNGKey(0)
    kx, kw, kl = jax.random.split(key, 3)

    x = jax.random.normal(kx, (B, C), dtype=jnp.float32)
    # Xavier-normal init (gain=1) for the (n_class, c) weight, as in the module.
    std = math.sqrt(2.0 / (N_CLASS + C))
    weight = jax.random.normal(kw, (N_CLASS, C), dtype=jnp.float32) * std
    label = jax.random.randint(kl, (B,), 0, N_CLASS, dtype=jnp.int32)

    aam = jax.jit(functools.partial(aam_softmax_loss, m=M, s=S,
                                    block_b=16, block_n=128))
    loss, prec1 = aam(x, weight, label)
    jax.block_until_ready((loss, prec1))

    # Tight check against a reference with identical numerics (bf16 operands,
    # s folded into the weight). prec1 may differ by at most one flipped
    # prediction if the two matmul paths differ by an ULP at a near-tie.
    mloss, mprec = _reference_matched(x, weight, label, m=M, s=S,
                                      matmul_dtype=jnp.bfloat16)
    assert jnp.allclose(loss, mloss, atol=2e-3, rtol=2e-3), (loss, mloss)
    assert abs(float(prec1) - float(mprec)) <= 100.0 / B + 1e-3, (prec1, mprec)

    # Semantics check against the exact-f32 torch-equivalent reference; bf16
    # matmul inputs perturb the cosines (and hence near-tie argmaxes), so the
    # loss tolerance is loose and prec1 may differ by a few flipped predictions.
    floss, fprec = _reference_f32(x, weight, label, m=M, s=S)
    assert jnp.allclose(loss, floss, atol=1e-1, rtol=5e-2), (loss, floss)
    assert abs(float(prec1) - float(fprec)) <= 3 * 100.0 / B + 1e-3, (prec1, fprec)

    print("KERNEL_OK")
</pallas_src>

<mosaic_0001>
module attributes {stable_mosaic.version = 11 : i64} {
  func.func @_aam_kernel(%arg0: i32, %arg1: i32, %arg2: memref<16x32xbf16, #tpu.memory_space<vmem>>, %arg3: memref<32x128xbf16, #tpu.memory_space<vmem>>, %arg4: memref<16x1xi32, #tpu.memory_space<vmem>>, %arg5: memref<16x1xf32, #tpu.memory_space<vmem>>, %arg6: memref<16x1xf32, #tpu.memory_space<vmem>>, %arg7: memref<16x1xf32, #tpu.memory_space<vmem>>, %arg8: memref<16x1xf32, #tpu.memory_space<vmem>>, %arg9: memref<16x1xf32, #tpu.memory_space<vmem>>, %arg10: memref<16x1xf32, #tpu.memory_space<vmem>>, %arg11: memref<16x1xi32, #tpu.memory_space<vmem>>) attributes {dimension_semantics = [#tpu.dimension_semantics<parallel>, #tpu.dimension_semantics<arbitrary>], iteration_bounds = array<i64: 2, 3>, scalar_prefetch = 0 : i64, scratch_operands = 5 : i64, tpu.core_type = #tpu.core_type<tc>, window_params = [{transform_indices = @transform_0, window_bounds = array<i64: 16, 32>}, {transform_indices = @transform_1, window_bounds = array<i64: 32, 128>}, {transform_indices = @transform_2, window_bounds = array<i64: 16, 1>}, {transform_indices = @transform_3, window_bounds = array<i64: 16, 1>}, {transform_indices = @transform_4, window_bounds = array<i64: 16, 1>}]} {
    %c0 = arith.constant 0 : index
    %c0_0 = arith.constant 0 : index
    %0 = vector.load %arg4[%c0, %c0_0] : memref<16x1xi32, #tpu.memory_space<vmem>>, vector<16x1xi32>
    %c0_i32 = arith.constant 0 : i32
    %1 = arith.cmpi eq, %arg1, %c0_i32 : i32
    %2 = arith.extui %1 : i1 to i32
    %c0_i32_1 = arith.constant 0 : i32
    %3 = arith.cmpi ne, %2, %c0_i32_1 : i32
    scf.if %3 {
      %cst_50 = arith.constant 0xFF800000 : f32
      %96 = vector.broadcast %cst_50 : f32 to vector<16x1xf32>
      %c0_51 = arith.constant 0 : index
      %c0_52 = arith.constant 0 : index
      %97 = vector.load %arg7[%c0_51, %c0_52] : memref<16x1xf32, #tpu.memory_space<vmem>>, vector<16x1xf32>
      tpu.vector_store %arg7[%c0_51, %c0_52], %96 {strides = array<i32>} : memref<16x1xf32, #tpu.memory_space<vmem>>, vector<16x1xf32>,
      %cst_53 = arith.constant 0.000000e+00 : f32
      %98 = vector.broadcast %cst_53 : f32 to vector<16x1xf32>
      %c0_54 = arith.constant 0 : index
      %c0_55 = arith.constant 0 : index
      %99 = vector.load %arg8[%c0_54, %c0_55] : memref<16x1xf32, #tpu.memory_space<vmem>>, vector<16x1xf32>
      tpu.vector_store %arg8[%c0_54, %c0_55], %98 {strides = array<i32>} : memref<16x1xf32, #tpu.memory_space<vmem>>, vector<16x1xf32>,
      %cst_56 = arith.constant 0.000000e+00 : f32
      %100 = vector.broadcast %cst_56 : f32 to vector<16x1xf32>
      %c0_57 = arith.constant 0 : index
      %c0_58 = arith.constant 0 : index
      %101 = vector.load %arg9[%c0_57, %c0_58] : memref<16x1xf32, #tpu.memory_space<vmem>>, vector<16x1xf32>
      tpu.vector_store %arg9[%c0_57, %c0_58], %100 {strides = array<i32>} : memref<16x1xf32, #tpu.memory_space<vmem>>, vector<16x1xf32>,
      %cst_59 = arith.constant 0xFF800000 : f32
      %102 = vector.broadcast %cst_59 : f32 to vector<16x1xf32>
      %c0_60 = arith.constant 0 : index
      %c0_61 = arith.constant 0 : index
      %103 = vector.load %arg10[%c0_60, %c0_61] : memref<16x1xf32, #tpu.memory_space<vmem>>, vector<16x1xf32>
      tpu.vector_store %arg10[%c0_60, %c0_61], %102 {strides = array<i32>} : memref<16x1xf32, #tpu.memory_space<vmem>>, vector<16x1xf32>,
      %c0_i32_62 = arith.constant 0 : i32
      %104 = vector.broadcast %c0_i32_62 : i32 to vector<16x1xi32>
      %c0_63 = arith.constant 0 : index
      %c0_64 = arith.constant 0 : index
      %105 = vector.load %arg11[%c0_63, %c0_64] : memref<16x1xi32, #tpu.memory_space<vmem>>, vector<16x1xi32>
      tpu.vector_store %arg11[%c0_63, %c0_64], %104 {strides = array<i32>} : memref<16x1xi32, #tpu.memory_space<vmem>>, vector<16x1xi32>,
    } else {
    }
    %c0_2 = arith.constant 0 : index
    %c0_3 = arith.constant 0 : index
    %4 = vector.load %arg2[%c0_2, %c0_3] : memref<16x32xbf16, #tpu.memory_space<vmem>>, vector<16x32xbf16>
    %c0_4 = arith.constant 0 : index
    %c0_5 = arith.constant 0 : index
    %5 = vector.load %arg3[%c0_4, %c0_5] : memref<32x128xbf16, #tpu.memory_space<vmem>>, vector<32x128xbf16>
    %cst = arith.constant dense<0.000000e+00> : vector<16x128xf32>
    %6 = tpu.matmul %4, %5, %cst {dimension_numbers = #tpu.dot_dimension_numbers<[1], [0], [0], [1], [0, 0, 1, 1], [], []>} : vector<16x32xbf16>, vector<32x128xbf16>, vector<16x128xf32> -> vector<16x128xf32>
    %7 = tpu.iota {dimensions = array<i32: 1>} : vector<16x128xi32>
    %c128_i32 = arith.constant 128 : i32
    %8 = arith.muli %arg1, %c128_i32 : i32
    %9 = vector.broadcast %8 : i32 to vector<16x1xi32>
    %10 = arith.subi %0, %9 : vector<16x1xi32>
    %11 = vector.broadcast %10 : vector<16x1xi32> to vector<16x128xi32>
    %12 = arith.cmpi eq, %7, %11 : vector<16x128xi32>
    %c0_i32_6 = arith.constant 0 : i32
    %13 = vector.broadcast %c0_i32_6 : i32 to vector<16x1xi32>
    %14 = arith.cmpi sge, %10, %13 : vector<16x1xi32>
    %c128_i32_7 = arith.constant 128 : i32
    %15 = vector.broadcast %c128_i32_7 : i32 to vector<16x1xi32>
    %16 = arith.cmpi slt, %10, %15 : vector<16x1xi32>
    %17 = arith.andi %14, %16 : vector<16x1xi1>
    %cst_8 = arith.constant 0.000000e+00 : f32
    %18 = vector.broadcast %cst_8 : f32 to vector<16x128xf32>
    %19 = arith.select %12, %6, %18 : vector<16x128xi1>, vector<16x128xf32>
    %cst_9 = arith.constant dense<0.000000e+00> : vector<16xf32>
    %20 = vector.multi_reduction <add>, %19, %cst_9 [1] : vector<16x128xf32> to vector<16xf32>
    %21 = vector.shape_cast %20 : vector<16xf32> to vector<16x1xf32>
    %cst_10 = arith.constant 0.0333333351 : f32
    %22 = vector.broadcast %cst_10 : f32 to vector<16x1xf32>
    %23 = arith.mulf %21, %22 : vector<16x1xf32>
    %24 = arith.mulf %23, %23 : vector<16x1xf32>
    %cst_11 = arith.constant 1.000000e+00 : f32
    %25 = vector.broadcast %cst_11 : f32 to vector<16x1xf32>
    %26 = arith.subf %25, %24 : vector<16x1xf32>
    %cst_12 = arith.constant 0.000000e+00 : f32
    %cst_13 = arith.constant 1.000000e+00 : f32
    %27 = vector.broadcast %cst_12 : f32 to vector<16x1xf32>
    %28 = arith.maximumf %27, %26 : vector<16x1xf32>
    %29 = vector.broadcast %cst_13 : f32 to vector<16x1xf32>
    %30 = arith.minimumf %29, %28 : vector<16x1xf32>
    %31 = math.sqrt %30 : vector<16x1xf32>
    %cst_14 = arith.constant 0.980066597 : f32
    %32 = vector.broadcast %cst_14 : f32 to vector<16x1xf32>
    %33 = arith.mulf %23, %32 : vector<16x1xf32>
    %cst_15 = arith.constant 0.198669329 : f32
    %34 = vector.broadcast %cst_15 : f32 to vector<16x1xf32>
    %35 = arith.mulf %31, %34 : vector<16x1xf32>
    %36 = arith.subf %33, %35 : vector<16x1xf32>
    %cst_16 = arith.constant -0.980066597 : f32
    %37 = vector.broadcast %cst_16 : f32 to vector<16x1xf32>
    %38 = arith.subf %23, %37 : vector<16x1xf32>
    %cst_17 = arith.constant 0.000000e+00 : f32
    %39 = vector.broadcast %cst_17 : f32 to vector<16x1xf32>
    %40 = arith.cmpf ogt, %38, %39 : vector<16x1xf32>
    %cst_18 = arith.constant 0.0397338644 : f32
    %41 = vector.broadcast %cst_18 : f32 to vector<16x1xf32>
    %42 = arith.subf %23, %41 : vector<16x1xf32>
    %43 = arith.select %40, %36, %42 : vector<16x1xi1>, vector<16x1xf32>
    %cst_19 = arith.constant 3.000000e+01 : f32
    %44 = vector.broadcast %cst_19 : f32 to vector<16x1xf32>
    %45 = arith.mulf %43, %44 : vector<16x1xf32>
    %46 = vector.shape_cast %45 : vector<16x1xf32> to vector<16x1xf32>
    %47 = vector.broadcast %46 : vector<16x1xf32> to vector<16x128xf32>
    %48 = arith.select %12, %47, %6 : vector<16x128xi1>, vector<16x128xf32>
    %c128_i32_20 = arith.constant 128 : i32
    %49 = arith.muli %arg1, %c128_i32_20 : i32
    %c300_i32 = arith.constant 300 : i32
    %50 = arith.subi %c300_i32, %49 : i32
    %51 = vector.broadcast %50 : i32 to vector<16x128xi32>
    %52 = arith.cmpi slt, %7, %51 : vector<16x128xi32>
    %cst_21 = arith.constant -1.000000e+30 : f32
    %53 = vector.broadcast %cst_21 : f32 to vector<16x128xf32>
    %54 = arith.select %52, %48, %53 : vector<16x128xi1>, vector<16x128xf32>
    %cst_22 = arith.constant dense<0xFF800000> : vector<16xf32>
    %55 = vector.multi_reduction <maximumf>, %54, %cst_22 [1] : vector<16x128xf32> to vector<16xf32>
    %56 = vector.shape_cast %55 : vector<16xf32> to vector<16x1xf32>
    %c0_23 = arith.constant 0 : index
    %c0_24 = arith.constant 0 : index
    %57 = vector.load %arg7[%c0_23, %c0_24] : memref<16x1xf32, #tpu.memory_space<vmem>>, vector<16x1xf32>
    %58 = arith.maximumf %57, %56 : vector<16x1xf32>
    %c0_25 = arith.constant 0 : index
    %c0_26 = arith.constant 0 : index
    %59 = vector.load %arg8[%c0_25, %c0_26] : memref<16x1xf32, #tpu.memory_space<vmem>>, vector<16x1xf32>
    %60 = arith.subf %57, %58 : vector<16x1xf32>
    %61 = math.exp %60 : vector<16x1xf32>
    %62 = arith.mulf %59, %61 : vector<16x1xf32>
    %63 = vector.broadcast %58 : vector<16x1xf32> to vector<16x128xf32>
    %64 = arith.subf %54, %63 : vector<16x128xf32>
    %65 = math.exp %64 : vector<16x128xf32>
    %cst_27 = arith.constant dense<0.000000e+00> : vector<16xf32>
    %66 = vector.multi_reduction <add>, %65, %cst_27 [1] : vector<16x128xf32> to vector<16xf32>
    %67 = vector.shape_cast %66 : vector<16xf32> to vector<16x1xf32>
    %68 = arith.addf %62, %67 : vector<16x1xf32>
    %c0_28 = arith.constant 0 : index
    %c0_29 = arith.constant 0 : index
    %69 = vector.load %arg8[%c0_28, %c0_29] : memref<16x1xf32, #tpu.memory_space<vmem>>, vector<16x1xf32>
    tpu.vector_store %arg8[%c0_28, %c0_29], %68 {strides = array<i32>} : memref<16x1xf32, #tpu.memory_space<vmem>>, vector<16x1xf32>,
    %c0_30 = arith.constant 0 : index
    %c0_31 = arith.constant 0 : index
    %70 = vector.load %arg7[%c0_30, %c0_31] : memref<16x1xf32, #tpu.memory_space<vmem>>, vector<16x1xf32>
    tpu.vector_store %arg7[%c0_30, %c0_31], %58 {strides = array<i32>} : memref<16x1xf32, #tpu.memory_space<vmem>>, vector<16x1xf32>,
    %c0_32 = arith.constant 0 : index
    %c0_33 = arith.constant 0 : index
    %71 = vector.load %arg9[%c0_32, %c0_33] : memref<16x1xf32, #tpu.memory_space<vmem>>, vector<16x1xf32>
    %cst_34 = arith.constant 0.000000e+00 : f32
    %72 = vector.broadcast %cst_34 : f32 to vector<16x1xf32>
    %73 = arith.select %17, %45, %72 : vector<16x1xi1>, vector<16x1xf32>
    %74 = arith.addf %71, %73 : vector<16x1xf32>
    %c0_35 = arith.constant 0 : index
    %c0_36 = arith.constant 0 : index
    %75 = vector.load %arg9[%c0_35, %c0_36] : memref<16x1xf32, #tpu.memory_space<vmem>>, vector<16x1xf32>
    tpu.vector_store %arg9[%c0_35, %c0_36], %74 {strides = array<i32>} : memref<16x1xf32, #tpu.memory_space<vmem>>, vector<16x1xf32>,
    %76 = vector.broadcast %56 : vector<16x1xf32> to vector<16x128xf32>
    %77 = arith.cmpf oge, %54, %76 : vector<16x128xf32>
    %c1073741824_i32 = arith.constant 1073741824 : i32
    %78 = vector.broadcast %c1073741824_i32 : i32 to vector<16x128xi32>
    %79 = arith.select %77, %7, %78 : vector<16x128xi1>, vector<16x128xi32>
    %cst_37 = arith.constant dense<2147483647> : vector<16xi32>
    %80 = vector.multi_reduction <minsi>, %79, %cst_37 [1] : vector<16x128xi32> to vector<16xi32>
    %81 = vector.shape_cast %80 : vector<16xi32> to vector<16x1xi32>
    %c0_38 = arith.constant 0 : index
    %c0_39 = arith.constant 0 : index
    %82 = vector.load %arg10[%c0_38, %c0_39] : memref<16x1xf32, #tpu.memory_space<vmem>>, vector<16x1xf32>
    %83 = arith.cmpf ogt, %56, %82 : vector<16x1xf32>
    %c128_i32_40 = arith.constant 128 : i32
    %84 = arith.muli %arg1, %c128_i32_40 : i32
    %85 = vector.broadcast %84 : i32 to vector<16x1xi32>
    %86 = arith.addi %81, %85 : vector<16x1xi32>
    %c0_41 = arith.constant 0 : index
    %c0_42 = arith.constant 0 : index
    %87 = vector.load %arg11[%c0_41, %c0_42] : memref<16x1xi32, #tpu.memory_space<vmem>>, vector<16x1xi32>
    %88 = arith.select %83, %86, %87 : vector<16x1xi1>, vector<16x1xi32>
    %c0_43 = arith.constant 0 : index
    %c0_44 = arith.constant 0 : index
    %89 = vector.load %arg11[%c0_43, %c0_44] : memref<16x1xi32, #tpu.memory_space<vmem>>, vector<16x1xi32>
    tpu.vector_store %arg11[%c0_43, %c0_44], %88 {strides = array<i32>} : memref<16x1xi32, #tpu.memory_space<vmem>>, vector<16x1xi32>,
    %c0_45 = arith.constant 0 : index
    %c0_46 = arith.constant 0 : index
    %90 = vector.load %arg10[%c0_45, %c0_46] : memref<16x1xf32, #tpu.memory_space<vmem>>, vector<16x1xf32>
    %91 = arith.maximumf %90, %56 : vector<16x1xf32>
    %c0_47 = arith.constant 0 : index
    %c0_48 = arith.constant 0 : index
    %92 = vector.load %arg10[%c0_47, %c0_48] : memref<16x1xf32, #tpu.memory_space<vmem>>, vector<16x1xf32>
    tpu.vector_store %arg10[%c0_47, %c0_48], %91 {strides = array<i32>} : memref<16x1xf32, #tpu.memory_space<vmem>>, vector<16x1xf32>,
    %c2_i32 = arith.constant 2 : i32
    %93 = arith.cmpi eq, %arg1, %c2_i32 : i32
    %94 = arith.extui %93 : i1 to i32
    %c0_i32_49 = arith.constant 0 : i32
    %95 = arith.cmpi ne, %94, %c0_i32_49 : i32
    scf.if %95 {
      %c0_50 = arith.constant 0 : index
      %c0_51 = arith.constant 0 : index
      %96 = vector.load %arg7[%c0_50, %c0_51] : memref<16x1xf32, #tpu.memory_space<vmem>>, vector<16x1xf32>
      %c0_52 = arith.constant 0 : index
      %c0_53 = arith.constant 0 : index
      %97 = vector.load %arg8[%c0_52, %c0_53] : memref<16x1xf32, #tpu.memory_space<vmem>>, vector<16x1xf32>
      %98 = math.log %97 : vector<16x1xf32>
      %99 = arith.addf %96, %98 : vector<16x1xf32>
      %c0_54 = arith.constant 0 : index
      %c0_55 = arith.constant 0 : index
      %100 = vector.load %arg9[%c0_54, %c0_55] : memref<16x1xf32, #tpu.memory_space<vmem>>, vector<16x1xf32>
      %101 = arith.subf %99, %100 : vector<16x1xf32>
      %c0_56 = arith.constant 0 : index
      %c0_57 = arith.constant 0 : index
      %102 = vector.load %arg5[%c0_56, %c0_57] : memref<16x1xf32, #tpu.memory_space<vmem>>, vector<16x1xf32>
      tpu.vector_store %arg5[%c0_56, %c0_57], %101 {strides = array<i32>} : memref<16x1xf32, #tpu.memory_space<vmem>>, vector<16x1xf32>,
      %c0_58 = arith.constant 0 : index
      %c0_59 = arith.constant 0 : index
      %103 = vector.load %arg11[%c0_58, %c0_59] : memref<16x1xi32, #tpu.memory_space<vmem>>, vector<16x1xi32>
      %104 = arith.cmpi eq, %103, %0 : vector<16x1xi32>
      %105 = arith.extui %104 : vector<16x1xi1> to vector<16x1xi32>
      %106 = arith.sitofp %105 : vector<16x1xi32> to vector<16x1xf32>
      %c0_60 = arith.constant 0 : index
      %c0_61 = arith.constant 0 : index
      %107 = vector.load %arg6[%c0_60, %c0_61] : memref<16x1xf32, #tpu.memory_space<vmem>>, vector<16x1xf32>
      tpu.vector_store %arg6[%c0_60, %c0_61], %106 {strides = array<i32>} : memref<16x1xf32, #tpu.memory_space<vmem>>, vector<16x1xf32>,
    } else {
    }
    return
  }
  func.func @transform_0(%arg0: i32, %arg1: i32) -> (i32, i32) {
    %c0_i32 = arith.constant 0 : i32
    %c0_i32_0 = arith.constant 0 : i32
    return %arg0, %c0_i32 : i32, i32
  }
  func.func @transform_1(%arg0: i32, %arg1: i32) -> (i32, i32) {
    %c0_i32 = arith.constant 0 : i32
    %c0_i32_0 = arith.constant 0 : i32
    return %c0_i32, %arg1 : i32, i32
  }
  func.func @transform_2(%arg0: i32, %arg1: i32) -> (i32, i32) {
    %c0_i32 = arith.constant 0 : i32
    %c0_i32_0 = arith.constant 0 : i32
    return %arg0, %c0_i32 : i32, i32
  }
  func.func @transform_3(%arg0: i32, %arg1: i32) -> (i32, i32) {
    %c0_i32 = arith.constant 0 : i32
    %c0_i32_0 = arith.constant 0 : i32
    return %arg0, %c0_i32 : i32, i32
  }
  func.func @transform_4(%arg0: i32, %arg1: i32) -> (i32, i32) {
    %c0_i32 = arith.constant 0 : i32
    %c0_i32_0 = arith.constant 0 : i32
    return %arg0, %c0_i32 : i32, i32
  }
}

</mosaic_0001>

<llo_original>
// kernel: aam_softmax_loss.1
$region0: #{aam_softmax_loss.1}
  #allocation0 [shape = 'u32[]', space=smem, size = 0x4, offset = 0x4, fixed_abs, tag = 'smem constant byte address 0x4 - core index']
  #allocation1 [shape = 'u32[144,128]{1,0:T(1,128)}', space=vmem, size = 0x12000, scoped, tag = 'internal scratch']
  #allocation2 [shape = 'f32[16,1]{1,0:T(8,128)}', space=vmem, size = 0x2000, scoped, tag = 'scratch operand']
  #allocation3 [shape = 'f32[16,1]{1,0:T(8,128)}', space=vmem, size = 0x2000, scoped, tag = 'scratch operand']
  #allocation4 [shape = 'f32[16,1]{1,0:T(8,128)}', space=vmem, size = 0x2000, scoped, tag = 'scratch operand']
  #allocation5 [shape = 'f32[16,1]{1,0:T(8,128)}', space=vmem, size = 0x2000, scoped, tag = 'scratch operand']
  #allocation6 [shape = 's32[16,1]{1,0:T(8,128)}', space=vmem, size = 0x2000, scoped, tag = 'scratch operand']
  %s0 = inlined_call_operand.vmem [shape: bf16[32,32], index: 0, kind: input, shape index: {}]
  %s1 = inlined_call_operand.vmem [shape: bf16[32,384], index: 1, kind: input, shape index: {}]
  %s2 = inlined_call_operand.vmem [shape: s32[32,1], index: 2, kind: input, shape index: {}]
  %s3 = inlined_call_operand.vmem [shape: f32[32,1], index: 3, kind: output, shape index: {0}]
  %s4 = inlined_call_operand.vmem [shape: f32[32,1], index: 4, kind: output, shape index: {1}]
  %5 = xla_tuple %s3, %s4
  %s6 = sld [smem:[#allocation0]]
  $region102: #{aam_softmax_loss.1} parent=0
    _
  %s8 = ssub.s32 1, %s6
  %s9 = scalar_select 0, %s8, %s6
  $region1: #{aam_softmax_loss.1} parent=0
    #allocation7 [shape = 'u8[16384]{0}', space=vmem, size = 0x4000, scoped, tag = 'input window, operand 1']
    loop: start=0, step=1, limit=8
    $region2: #{aam_softmax_loss.1} parent=1 // loop_pre_header
      _
    $region3: #{aam_softmax_loss.1} parent=1 // loop_header
      %s11 = sphi 0, %s15
      %p12 = scmp.ge.s32.totalorder %s11, 8
      %s18 = sphi 0, %s30
      %s19 = sphi 0, %s26
      %s20 = sphi 0, %s18
      %s21 = sphi 0, %s19
      %s22 = sphi 0, %s20
      %s23 = sphi 0, %s21
      %s33 = sphi 0, %s35
      %s36 = sphi 0, %s33
      %s37 = sphi 0, %s36
      %s53 = sphi 0, %s37
      %s59 = sphi 0, %s61
      %s62 = sphi 0, %s59
      %s63 = sphi 0, %s62
      %s79 = sphi 0, %s63
      %s85 = sphi 0, %s87
      %s88 = sphi 0, %s85
      %s89 = sphi 0, %s88
      %s105 = sphi 0, %s89
      %s111 = sphi 0, %s113
      %s114 = sphi 0, %s111
      %s115 = sphi 0, %s114
      %s131 = sphi 0, %s115
      %s137 = sphi 0, %s139
      %s140 = sphi 0, %s137
      %s141 = sphi 0, %s140
      %s157 = sphi 0, %s141
    $region4: #{aam_softmax_loss.1} parent=1 // loop_header_branch
      %14 = sbr.rel (%p12) target = $region8
    $region5: #{aam_softmax_loss.1} parent=1 // loop_body
      %s16 = ssub.s32 %s11, 1
      %s17 = ssub.s32 %s11, 2
      %s24 = sadd.s32 1, %s19
      %p25 = scmp.ge.s32.totalorder %s24, 3
      %s26 = scalar_select %p25, 0, %s24
      %s27 = sadd.s32 1, %s18
      %s28 = scalar_select %p25, %s27, %s18
      %p29 = scmp.ge.s32.totalorder %s28, 2
      %s30 = scalar_select %p29, 0, %s28
      %s31 = ssub.s32 %s18, %s30
      %p32 = scmp.eq.s32.totalorder %s31, 0
      %s34 = sadd.s32 %s33, 1
      %s35 = scalar_select %p32, %s33, %s34
      %p38 = pneg %p32
      %p39 = scmp.eq.s32.totalorder %s11, 5
      %p40 = por %p38, %p39
      %p41 = scmp.ne.s32.totalorder %s33, %s36
      %p42 = scmp.eq.s32.totalorder %s11, 0
      %p43 = por %p41, %p42
      %p44 = scmp.ne.s32.totalorder %s33, %s36
      %p45 = scmp.eq.s32.totalorder %s16, 5
      %p46 = por %p44, %p45
      %p47 = scmp.ne.s32.totalorder %s36, %s37
      %p48 = scmp.eq.s32.totalorder %s16, 0
      %p49 = por %p47, %p48
      %p50 = scmp.ne.s32.totalorder %s36, %s37
      %p51 = scmp.eq.s32.totalorder %s17, 5
      %p52 = por %p50, %p51
      %p54 = scmp.ne.s32.totalorder %s37, %s53
      %p55 = scmp.eq.s32.totalorder %s17, 0
      %p56 = por %p54, %p55
      %s57 = ssub.s32 %s19, %s26
      %p58 = scmp.eq.s32.totalorder %s57, 0
      %s60 = sadd.s32 %s59, 1
      %s61 = scalar_select %p58, %s59, %s60
      %p64 = pneg %p58
      %p65 = scmp.eq.s32.totalorder %s11, 5
      %p66 = por %p64, %p65
      %p67 = scmp.ne.s32.totalorder %s59, %s62
      %p68 = scmp.eq.s32.totalorder %s11, 0
      %p69 = por %p67, %p68
      %p70 = scmp.ne.s32.totalorder %s59, %s62
      %p71 = scmp.eq.s32.totalorder %s16, 5
      %p72 = por %p70, %p71
      %p73 = scmp.ne.s32.totalorder %s62, %s63
      %p74 = scmp.eq.s32.totalorder %s16, 0
      %p75 = por %p73, %p74
      %p76 = scmp.ne.s32.totalorder %s62, %s63
      %p77 = scmp.eq.s32.totalorder %s17, 5
      %p78 = por %p76, %p77
      %p80 = scmp.ne.s32.totalorder %s63, %s79
      %p81 = scmp.eq.s32.totalorder %s17, 0
      %p82 = por %p80, %p81
      %s83 = ssub.s32 %s18, %s30
      %p84 = scmp.eq.s32.totalorder %s83, 0
      %s86 = sadd.s32 %s85, 1
      %s87 = scalar_select %p84, %s85, %s86
      %p90 = pneg %p84
      %p91 = scmp.eq.s32.totalorder %s11, 5
      %p92 = por %p90, %p91
      %p93 = scmp.ne.s32.totalorder %s85, %s88
      %p94 = scmp.eq.s32.totalorder %s11, 0
      %p95 = por %p93, %p94
      %p96 = scmp.ne.s32.totalorder %s85, %s88
      %p97 = scmp.eq.s32.totalorder %s16, 5
      %p98 = por %p96, %p97
      %p99 = scmp.ne.s32.totalorder %s88, %s89
      %p100 = scmp.eq.s32.totalorder %s16, 0
      %p101 = por %p99, %p100
      %p102 = scmp.ne.s32.totalorder %s88, %s89
      %p103 = scmp.eq.s32.totalorder %s17, 5
      %p104 = por %p102, %p103
      %p106 = scmp.ne.s32.totalorder %s89, %s105
      %p107 = scmp.eq.s32.totalorder %s17, 0
      %p108 = por %p106, %p107
      %s109 = ssub.s32 %s18, %s30
      %p110 = scmp.eq.s32.totalorder %s109, 0
      %s112 = sadd.s32 %s111, 1
      %s113 = scalar_select %p110, %s111, %s112
      %p116 = pneg %p110
      %p117 = scmp.eq.s32.totalorder %s11, 5
      %p118 = por %p116, %p117
      %p119 = scmp.ne.s32.totalorder %s111, %s114
      %p120 = scmp.eq.s32.totalorder %s11, 0
      %p121 = por %p119, %p120
      %p122 = scmp.ne.s32.totalorder %s111, %s114
      %p123 = scmp.eq.s32.totalorder %s16, 5
      %p124 = por %p122, %p123
      %p125 = scmp.ne.s32.totalorder %s114, %s115
      %p126 = scmp.eq.s32.totalorder %s16, 0
      %p127 = por %p125, %p126
      %p128 = scmp.ne.s32.totalorder %s114, %s115
      %p129 = scmp.eq.s32.totalorder %s17, 5
      %p130 = por %p128, %p129
      %p132 = scmp.ne.s32.totalorder %s115, %s131
      %p133 = scmp.eq.s32.totalorder %s17, 0
      %p134 = por %p132, %p133
      %s135 = ssub.s32 %s18, %s30
      %p136 = scmp.eq.s32.totalorder %s135, 0
      %s138 = sadd.s32 %s137, 1
      %s139 = scalar_select %p136, %s137, %s138
      %p142 = pneg %p136
      %p143 = scmp.eq.s32.totalorder %s11, 5
      %p144 = por %p142, %p143
      %p145 = scmp.ne.s32.totalorder %s137, %s140
      %p146 = scmp.eq.s32.totalorder %s11, 0
      %p147 = por %p145, %p146
      %p148 = scmp.ne.s32.totalorder %s137, %s140
      %p149 = scmp.eq.s32.totalorder %s16, 5
      %p150 = por %p148, %p149
      %p151 = scmp.ne.s32.totalorder %s140, %s141
      %p152 = scmp.eq.s32.totalorder %s16, 0
      %p153 = por %p151, %p152
      %p154 = scmp.ne.s32.totalorder %s140, %s141
      %p155 = scmp.eq.s32.totalorder %s17, 5
      %p156 = por %p154, %p155
      %p158 = scmp.ne.s32.totalorder %s141, %s157
      %p159 = scmp.eq.s32.totalorder %s17, 0
      %p160 = por %p158, %p159
      %p161 = scmp.le.s32.totalorder 1, %s11
      %p162 = scmp.lt.s32.totalorder %s11, 7
      %p163 = pnand %p161, %p162
      %p164 = pneg %p163
      // Predicated region
      $region9: #{aam_softmax_loss.1} parent=5 // pred_check
        _
      $region10: #{aam_softmax_loss.1} parent=5 // pred_check_branch
        %166 = sbr.rel (%p163) target = $region12
      $region11: #{aam_softmax_loss.1} parent=5 // pred_region
        %s167 = ssub.s32 %s11, 1
      $region12: #{aam_softmax_loss.1} parent=5 // pred_fallthru
        _
      %p168 = scmp.lt.s32.totalorder %s11, 6
      // Predicated region
      $region13: #{aam_softmax_loss.1} parent=5 // pred_check
        %p169 = pneg %p168
      $region14: #{aam_softmax_loss.1} parent=5 // pred_check_branch
        %171 = sbr.rel (%p169) target = $region16
      $region15: #{aam_softmax_loss.1} parent=5 // pred_region
        // Predicated region
        $region17: #{aam_softmax_loss.1} parent=15 // pred_check
          %p172 = pneg %p43
        $region18: #{aam_softmax_loss.1} parent=15 // pred_check_branch
          %174 = sbr.rel (%p172) target = $region20
        $region19: #{aam_softmax_loss.1} parent=15 // pred_region
          %s175 = smul.u32 2, %s18
          %p176 = scmp.lt.s32.totalorder %s175, 3
          %s177 = scalar_select %p176, %s175, 3
          %s178 = smul.addr %s177, 4
          %s179 = scalar_lea.vmem %s0, %s178
          %s180 = smul.u32 2, %s18
        $region20: #{aam_softmax_loss.1} parent=15 // pred_fallthru
          _
        // Predicated region
        $region21: #{aam_softmax_loss.1} parent=15 // pred_check
          %p181 = pneg %p69
        $region22: #{aam_softmax_loss.1} parent=15 // pred_check_branch
          %183 = sbr.rel (%p181) target = $region24
        $region23: #{aam_softmax_loss.1} parent=15 // pred_region
          %s184 = sand.u32 %s59, 1
          %s185 = sand.u32 %s59, 1
          %s186 = smul.addr %s185, 16
          %s187 = scalar_lea.vmem [#allocation7], %s186
          %s188 = smul.addr %s19, 4
          %s189 = scalar_lea.vmem %s1, %s188
          // Predicated region
          $region25: #{aam_softmax_loss.1} parent=23 // pred_check
            _
          $region26: #{aam_softmax_loss.1} parent=23 // pred_check_branch
            %191 = sbr.rel (0) target = $region28
          $region27: #{aam_softmax_loss.1} parent=23 // pred_region
            // Predicated region
            $region29: #{aam_softmax_loss.1} parent=27 // pred_check
              _
            $region30: #{aam_softmax_loss.1} parent=27 // pred_check_branch
              %193 = sbr.rel target = $region32
            $region31: #{aam_softmax_loss.1} parent=27 // pred_region
              // Predicated region
              $region44: #{aam_softmax_loss.1} parent=31 // pred_check
                _
              $region45: #{aam_softmax_loss.1} parent=31 // pred_check_branch
                %214 = sbr.rel (0) target = $region47
              $region46: #{aam_softmax_loss.1} parent=31 // pred_region
                loop: start=0, step=1, limit=1
                $region48: #{aam_softmax_loss.1} parent=46 // loop_pre_header
                  _
                $region49: #{aam_softmax_loss.1} parent=46 // loop_header
                  %s216 = sphi 0, %s220
                  %p217 = scmp.ge.s32.totalorder %s216, 1
                  %s221 = sphi %s189, %s189
                  %s222 = sphi %s187, %s187
                $region50: #{aam_softmax_loss.1} parent=46 // loop_header_branch
                  %219 = sbr.rel (%p217) target = $region54
                $region51: #{aam_softmax_loss.1} parent=46 // loop_body
                  _
                $region52: #{aam_softmax_loss.1} parent=46 // loop_footer
                  %s220 = sadd.s32 1, %s216
                $region53: #{aam_softmax_loss.1} parent=46 // loop_footer_branch
                  %215 = sbr.rel target = $region49
                $region54: #{aam_softmax_loss.1} parent=46 // loop_exit
                  _
                loop: start=0, step=1, limit=1
                $region55: #{aam_softmax_loss.1} parent=46 // loop_pre_header
                  _
                $region56: #{aam_softmax_loss.1} parent=46 // loop_header
                  %s225 = sphi 0, %s229
                  %p226 = scmp.ge.s32.totalorder %s225, 1
                  %s230 = sphi %s189, %s189
                  %s231 = sphi %s187, %s187
                $region57: #{aam_softmax_loss.1} parent=46 // loop_header_branch
                  %228 = sbr.rel (%p226) target = $region61
                $region58: #{aam_softmax_loss.1} parent=46 // loop_body
                  %v232 = vld [vmem:[%s230] sm:$0xf]
                  %233 = vst [vmem:[%s231] sm:$0xf] %v232
                  %v234 = vld [vmem:[%s230 + $0xc] sm:$0xf]
                  %235 = vst [vmem:[%s231 + $0x4] sm:$0xf] %v234
                  %v236 = vld [vmem:[%s230 + $0x18] sm:$0xf]
                  %237 = vst [vmem:[%s231 + $0x8] sm:$0xf] %v236
                  %v238 = vld [vmem:[%s230 + $0x24] sm:$0xf]
                  %239 = vst [vmem:[%s231 + $0xc] sm:$0xf] %v238
                $region59: #{aam_softmax_loss.1} parent=46 // loop_footer
                  %s229 = sadd.s32 1, %s225
                $region60: #{aam_softmax_loss.1} parent=46 // loop_footer_branch
                  %224 = sbr.rel target = $region56
                $region61: #{aam_softmax_loss.1} parent=46 // loop_exit
                  _
              $region47: #{aam_softmax_loss.1} parent=31 // pred_fallthru
                _
            $region32: #{aam_softmax_loss.1} parent=27 // pred_fallthru
              _
            // Predicated region
            $region33: #{aam_softmax_loss.1} parent=27 // pred_check
              _
            $region34: #{aam_softmax_loss.1} parent=27 // pred_check_branch
              %195 = sbr.rel (0) target = $region36
            $region35: #{aam_softmax_loss.1} parent=27 // pred_region
              loop: start=0, step=1, limit=1
              $region37: #{aam_softmax_loss.1} parent=35 // loop_pre_header
                _
              $region38: #{aam_softmax_loss.1} parent=35 // loop_header
                %s198 = sphi 0, %s202
                %p199 = scmp.ge.s32.totalorder %s198, 1
                %s203 = sphi %s189, %s189
                %s204 = sphi %s187, %s187
              $region39: #{aam_softmax_loss.1} parent=35 // loop_header_branch
                %201 = sbr.rel (%p199) target = $region43
              $region40: #{aam_softmax_loss.1} parent=35 // loop_body
                %v205 = vld [vmem:[%s203] sm:$0xf]
                %206 = vst [vmem:[%s204] sm:$0xf] %v205
                %v207 = vld [vmem:[%s203 + $0xc] sm:$0xf]
                %208 = vst [vmem:[%s204 + $0x4] sm:$0xf] %v207
                %v209 = vld [vmem:[%s203 + $0x18] sm:$0xf]
                %210 = vst [vmem:[%s204 + $0x8] sm:$0xf] %v209
                %v211 = vld [vmem:[%s203 + $0x24] sm:$0xf]
                %212 = vst [vmem:[%s204 + $0xc] sm:$0xf] %v211
              $region41: #{aam_softmax_loss.1} parent=35 // loop_footer
                %s202 = sadd.s32 1, %s198
              $region42: #{aam_softmax_loss.1} parent=35 // loop_footer_branch
                %197 = sbr.rel target = $region38
              $region43: #{aam_softmax_loss.1} parent=35 // loop_exit
                _
            $region36: #{aam_softmax_loss.1} parent=27 // pred_fallthru
              _
          $region28: #{aam_softmax_loss.1} parent=23 // pred_fallthru
            _
          %240 = vnop
        $region24: #{aam_softmax_loss.1} parent=15 // pred_fallthru
          _
        // Predicated region
        $region62: #{aam_softmax_loss.1} parent=15 // pred_check
          %p241 = pneg %p95
        $region63: #{aam_softmax_loss.1} parent=15 // pred_check_branch
          %243 = sbr.rel (%p241) target = $region65
        $region64: #{aam_softmax_loss.1} parent=15 // pred_region
          %s244 = smul.u32 2, %s18
          %p245 = scmp.lt.s32.totalorder %s244, 3
          %s246 = scalar_select %p245, %s244, 3
          %s247 = smul.addr %s246, 8
          %s248 = scalar_lea.vmem %s2, %s247
          %s249 = smul.u32 2, %s18
        $region65: #{aam_softmax_loss.1} parent=15 // pred_fallthru
          _
      $region16: #{aam_softmax_loss.1} parent=5 // pred_fallthru
        _
      %p250 = scmp.le.s32.totalorder 1, %s11
      %p251 = scmp.lt.s32.totalorder %s11, 7
      %p252 = pnand %p250, %p251
      %p253 = pneg %p252
      // Predicated region
      $region66: #{aam_softmax_loss.1} parent=5 // pred_check
        _
      $region67: #{aam_softmax_loss.1} parent=5 // pred_check_branch
        %255 = sbr.rel (%p252) target = $region69
      $region68: #{aam_softmax_loss.1} parent=5 // pred_region
        %s256 = ssub.s32 %s11, 1
        %s257 = sand.u32 %s62, 1
        %s258 = sand.u32 %s62, 1
        %s259 = smul.addr %s258, 16
        %s260 = scalar_lea.vmem [#allocation7], %s259
        // Predicated region
        $region70: #{aam_softmax_loss.1} parent=68 // pred_check
          %p261 = pneg %p75
        $region71: #{aam_softmax_loss.1} parent=68 // pred_check_branch
          %263 = sbr.rel (%p261) target = $region73
        $region72: #{aam_softmax_loss.1} parent=68 // pred_region
          _
        $region73: #{aam_softmax_loss.1} parent=68 // pred_fallthru
          _
        %s264 = smul.u32 2, %s20
        %p265 = scmp.lt.s32.totalorder %s264, 3
        %s266 = scalar_select %p265, %s264, 3
        %s267 = smul.addr %s266, 4
        %s268 = scalar_lea.vmem %s0, %s267
        %p269 = pneg %p49
        %p270 = pneg %p46
        %s271 = sand.u32 %s62, 1
        %s272 = sand.u32 %s62, 1
        %s273 = smul.addr %s272, 16
        %s274 = scalar_lea.vmem [#allocation7], %s273
        %p275 = pneg %p75
        %p276 = pneg %p72
        %s277 = smul.u32 2, %s20
        %p278 = scmp.lt.s32.totalorder %s277, 3
        %s279 = scalar_select %p278, %s277, 3
        %s280 = smul.addr %s279, 8
        %s281 = scalar_lea.vmem %s2, %s280
        %p282 = pneg %p101
        %p283 = pneg %p98
        %p284 = pneg %p127
        %p285 = pneg %p124
        %s286 = smul.u32 2, %s20
        %p287 = scmp.lt.s32.totalorder %s286, 3
        %s288 = scalar_select %p287, %s286, 3
        %s289 = smul.addr %s288, 8
        %s290 = scalar_lea.vmem %s3, %s289
        %p291 = pneg %p153
        %p292 = pneg %p150
        %s293 = smul.u32 2, %s20
        %p294 = scmp.lt.s32.totalorder %s293, 3
        %s295 = scalar_select %p294, %s293, 3
        %s296 = smul.addr %s295, 8
        %s297 = scalar_lea.vmem %s4, %s296
        %s298 = smul.u32 2, %s20
        %p299 = scmp.lt.s32.totalorder %s298, 3
        %s300 = scalar_select %p299, %s298, 3
        %s301 = smul.addr %s300, 4
        %s302 = scalar_lea.vmem %s0, %s301
        %s303 = smul.u32 2, %s20
        %s304 = smul.u32 2, %s20
        %p305 = scmp.lt.s32.totalorder %s304, 3
        %s306 = scalar_select %p305, %s304, 3
        %s307 = smul.addr %s306, 8
        %s308 = scalar_lea.vmem %s2, %s307
        %s309 = smul.u32 2, %s20
        %s310 = smul.u32 2, %s20
        %p311 = scmp.lt.s32.totalorder %s310, 3
        %s312 = scalar_select %p311, %s310, 3
        %s313 = smul.addr %s312, 8
        %s314 = scalar_lea.vmem %s3, %s313
        %s315 = smul.u32 2, %s20
        %s316 = smul.u32 2, %s20
        %p317 = scmp.lt.s32.totalorder %s316, 3
        %s318 = scalar_select %p317, %s316, 3
        %s319 = smul.addr %s318, 8
        %s320 = scalar_lea.vmem %s4, %s319
        %s321 = smul.u32 2, %s20
        %v323 = vld [vmem:[%s308] sm:$0xff]
        %v324 = vld [vmem:[%s308 + $0x8] sm:$0xff]
        %p325 = scmp.eq.s32.totalorder %s21, 0
        // Predicated region
        $region74: #{aam_softmax_loss.1} parent=68 // pred_check
          %p326 = pneg %p325
        $region75: #{aam_softmax_loss.1} parent=68 // pred_check_branch
          %328 = sbr.rel (%p326) target = $region77
        $region76: #{aam_softmax_loss.1} parent=68 // pred_region
          %vm329 = vcmask 7168
          %330 = vst.msk [vmem:[#allocation2] sm:$0xff] %vm329, -inf
          %331 = vst.msk [vmem:[#allocation2 + $0x8] sm:$0xff] %vm329, -inf
          %332 = vst.msk [vmem:[#allocation3] sm:$0xff] %vm329, 0.0
          %333 = vst.msk [vmem:[#allocation3 + $0x8] sm:$0xff] %vm329, 0.0
          %334 = vst.msk [vmem:[#allocation4] sm:$0xff] %vm329, 0.0
          %335 = vst.msk [vmem:[#allocation4 + $0x8] sm:$0xff] %vm329, 0.0
          %336 = vst.msk [vmem:[#allocation5] sm:$0xff] %vm329, -inf
          %337 = vst.msk [vmem:[#allocation5 + $0x8] sm:$0xff] %vm329, -inf
          %338 = vst.msk [vmem:[#allocation6] sm:$0xff] %vm329, 0
          %339 = vst.msk [vmem:[#allocation6 + $0x8] sm:$0xff] %vm329, 0
        $region77: #{aam_softmax_loss.1} parent=68 // pred_fallthru
          _
        %v340 = vld [vmem:[%s302] sm:$0xf]
        %v341 = vld [vmem:[%s302 + $0x4] sm:$0xf]
        %v342 = vld [vmem:[%s260] sm:$0xf]
        %v343 = vld [vmem:[%s260 + $0x4] sm:$0xf]
        %v344 = vld [vmem:[%s260 + $0x8] sm:$0xf]
        %v345 = vld [vmem:[%s260 + $0xc] sm:$0xf]
        %v348 = vunpack.c.l.b16 %v340
        %v349 = vunpack.c.l.b16 %v341
        %v350 = vpack.c.b16 %v349, %v348
        %v355 = vunpack.c.l.b16 %v342
        %v356 = vunpack.c.l.b16 %v343
        %v357 = vunpack.c.l.b16 %v344
        %v358 = vunpack.c.l.b16 %v345
        %v359 = vpack.c.b16 %v356, %v355
        %v360 = vpack.c.b16 %v358, %v357
        %vm363 = vcmask 261120
        %v365 = vsel %vm363, %v350, 0
        %367 = vmatprep.subr.bf16.mxu0 0
        %368 = vmatpush1.bf16.msra.mxu0 %v359
        %369 = vmatprep.subr.bf16.mxu0 0
        %370 = vmatpush1.bf16.msra.mxu0 %v360
        %371 = vmatprep.subr.bf16.mxu0 0
        %372 = vmatpush1.bf16.msra.mxu0 0
        %373 = vmatprep.subr.bf16.mxu0 0
        %374 = vmatpush1.bf16.msra.mxu0 0
        %375 = vmatprep.subr.bf16.mxu0 0
        %376 = vmatpush1.bf16.msra.mxu0 0
        %377 = vmatprep.subr.bf16.mxu0 0
        %378 = vmatpush1.bf16.msra.mxu0 0
        %379 = vmatprep.subr.bf16.mxu0 0
        %380 = vmatpush1.bf16.msra.mxu0 0
        %381 = vmatprep.subr.bf16.mxu0 0
        %382 = vmatpush1.bf16.msra.mxu0 0
        %383 = vmatprep.subr.bf16.mxu0 0
        %384 = vmatpush1.bf16.msra.mxu0 0
        %385 = vmatprep.subr.bf16.mxu0 0
        %386 = vmatpush1.bf16.msra.mxu0 0
        %387 = vmatprep.subr.bf16.mxu0 0
        %388 = vmatpush1.bf16.msra.mxu0 0
        %389 = vmatprep.subr.bf16.mxu0 0
        %390 = vmatpush1.bf16.msra.mxu0 0
        %391 = vmatprep.subr.bf16.mxu0 0
        %392 = vmatpush1.bf16.msra.mxu0 0
        %393 = vmatprep.subr.bf16.mxu0 0
        %394 = vmatpush1.bf16.msra.mxu0 0
        %395 = vmatprep.subr.bf16.mxu0 0
        %396 = vmatpush1.bf16.msra.mxu0 0
        %397 = vmatprep.subr.bf16.mxu0 0
        %398 = vmatpush1.bf16.msra.mxu0 0
        %399 = vmatprep.mubr.bf16.mxu0 0
        %400 = vmatmul.mubr.bf16.gmra.mrb[0].mxu0 %v365
        %v401 = vpop.f32.mrb[0].mxu0
        %v402 = vadd.f32 0.0, %v401
        %v403 = vpop.f32.mrb[0].mxu0
        %v404 = vpop.f32.mrb[0].mxu0
        %v405 = vadd.f32 0.0, %v404
        %v406 = vpop.f32.mrb[0].mxu0
        %407 = vdwg.mxu0
        %v408 = vlaneseq
        %v409 = vand.u32 %v408, 127
        %s410 = smul.u32 %s21, 128
        %v411 = vstv %s410
        %v412 = vsub.s32 %v323, %v411
        %v413 = vsub.s32 %v324, %v411
        %414 = vset.pattern.permute.xlu0 0
        %415 = vperm.xlu0 %414, %v412
        %v416 = vpop.permute.xlu0 %415
        %417 = vset.pattern.permute.xlu0 0
        %418 = vperm.xlu0 %417, %v413
        %v419 = vpop.permute.xlu0 %418
        %vm420 = vcmp.eq.s32.totalorder %v409, %v416
        %vm421 = vcmp.eq.s32.totalorder %v409, %v419
        %vm422 = vcmp.ge.s32.totalorder %v412, 0
        %vm423 = vcmp.ge.s32.totalorder %v413, 0
        %vm424 = vcmp.lt.s32.totalorder %v412, 128
        %vm425 = vcmp.lt.s32.totalorder %v413, 128
        %vm426 = vmand %vm422, %vm424
        %vm427 = vmand %vm423, %vm425
        %v428 = vsel %vm420, %v402, 0.0
        %v429 = vsel %vm421, %v405, 0.0
        %430 = vadd.xlane.f32.xlu0 %v428
        %v431 = vpop.xlane.xlu0 %430
        %432 = vadd.xlane.f32.xlu0 %v429
        %v433 = vpop.xlane.xlu0 %432
        %v434 = vmul.f32 %v431, 0.033333335
        %v435 = vmul.f32 %v433, 0.033333335
        %v436 = vmul.f32 %v434, %v434
        %v437 = vmul.f32 %v435, %v435
        %v438 = vsub.f32 1.0, %v436
        %v439 = vsub.f32 1.0, %v437
        %v440 = vmax.f32 %v438, 0.0
        %v441 = vmax.f32 %v439, 0.0
        %v442 = vmin.f32 %v440, 1.0
        %v443 = vmin.f32 %v441, 1.0
        %v444 = vrsqrt.pop %v442
        %v445 = vmul.f32 %v442, %v444
        %vm446 = vcmp.eq.f32.partialorder %v442, inf
        %v447 = vsel %vm446, %v442, %v445
        %vm448 = vcmp.eq.f32.partialorder %v442, 0.0
        %v449 = vand.u32 %v442, 2147483648
        %v450 = vsel %vm448, %v449, %v447
        %v451 = vrsqrt.pop %v443
        %v452 = vmul.f32 %v443, %v451
        %vm453 = vcmp.eq.f32.partialorder %v443, inf
        %v454 = vsel %vm453, %v443, %v452
        %vm455 = vcmp.eq.f32.partialorder %v443, 0.0
        %v456 = vand.u32 %v443, 2147483648
        %v457 = vsel %vm455, %v456, %v454
        %v458 = vmul.f32 %v434, 0.9800666
        %v459 = vmul.f32 %v435, 0.9800666
        %v460 = vmul.f32 %v450, 0.19866933
        %v461 = vmul.f32 %v457, 0.19866933
        %v462 = vsub.f32 %v458, %v460
        %v463 = vsub.f32 %v459, %v461
        %v464 = vsub.f32 %v434, -0.9800666
        %v465 = vsub.f32 %v435, -0.9800666
        %vm466 = vcmp.gt.f32.partialorder %v464, 0.0
        %vm467 = vcmp.gt.f32.partialorder %v465, 0.0
        %v468 = vsub.f32 %v434, 0.039733864
        %v469 = vsub.f32 %v435, 0.039733864
        %v470 = vsel %vm466, %v462, %v468
        %v471 = vsel %vm467, %v463, %v469
        %v472 = vmul.f32 %v470, 30.0
        %v473 = vmul.f32 %v471, 30.0
        %v474 = vsel %vm420, %v472, %v402
        %v475 = vsel %vm421, %v473, %v405
        %s476 = ssub.s32 300, %s410
        %v477 = vstv %s476
        %vm478 = vcmp.lt.s32.totalorder %v409, %v477
        %v479 = vsel %vm478, %v474, -1e+30
        %v480 = vsel %vm478, %v475, -1e+30
        %481 = vmax.xlane.f32.xlu0 %v479
        %v482 = vpop.xlane.xlu0 %481
        %483 = vmax.xlane.f32.xlu0 %v480
        %v484 = vpop.xlane.xlu0 %483
        %v485 = vld [vmem:[#allocation2] sm:$0xff]
        %v486 = vld [vmem:[#allocation2 + $0x8] sm:$0xff]
        %v487 = vmax.f32 %v485, %v482
        %v488 = vmax.f32 %v486, %v484
        %v489 = vld [vmem:[#allocation3] sm:$0xff]
        %v490 = vld [vmem:[#allocation3 + $0x8] sm:$0xff]
        %v491 = vsub.f32 %v485, %v487
        %v492 = vsub.f32 %v486, %v488
        %v493 = vmul.f32 %v491, 1.442695
        %v494 = vpow.pop %v493
        %v495 = vmul.f32 %v492, 1.442695
        %v496 = vpow.pop %v495
        %v497 = vmul.f32 %v489, %v494
        %v498 = vmul.f32 %v490, %v496
        %500 = vset.pattern.permute.xlu0 0
        %501 = vperm.xlu0 %500, %v487
        %v502 = vpop.permute.xlu0 %501
        %505 = vset.pattern.permute.xlu0 0
        %506 = vperm.xlu0 %505, %v488
        %v507 = vpop.permute.xlu0 %506
        %v509 = vsub.f32 %v479, %v502
        %v510 = vsub.f32 %v480, %v507
        %v511 = vmul.f32 %v509, 1.442695
        %v512 = vpow.pop %v511
        %v513 = vmul.f32 %v510, 1.442695
        %v514 = vpow.pop %v513
        %515 = vadd.xlane.f32.xlu0 %v512
        %v516 = vpop.xlane.xlu0 %515
        %517 = vadd.xlane.f32.xlu0 %v514
        %v518 = vpop.xlane.xlu0 %517
        %v519 = vadd.f32 %v497, %v516
        %v520 = vadd.f32 %v498, %v518
        %vm521 = vcmask 7168
        %522 = vst.msk [vmem:[#allocation3] sm:$0xff] %vm521, %v519
        %523 = vst.msk [vmem:[#allocation3 + $0x8] sm:$0xff] %vm521, %v520
        %524 = vst.msk [vmem:[#allocation2] sm:$0xff] %vm521, %v487
        %525 = vst.msk [vmem:[#allocation2 + $0x8] sm:$0xff] %vm521, %v488
        %v526 = vld [vmem:[#allocation4] sm:$0xff]
        %v527 = vld [vmem:[#allocation4 + $0x8] sm:$0xff]
        %v528 = vsel %vm426, %v472, 0.0
        %v529 = vsel %vm427, %v473, 0.0
        %v530 = vadd.f32 %v526, %v528
        %v531 = vadd.f32 %v527, %v529
        %532 = vst.msk [vmem:[#allocation4] sm:$0xff] %vm521, %v530
        %533 = vst.msk [vmem:[#allocation4 + $0x8] sm:$0xff] %vm521, %v531
        %vm534 = vcmp.ge.f32.partialorder %v479, %v482
        %vm535 = vcmp.ge.f32.partialorder %v480, %v484
        %v536 = vsel %vm534, %v409, 1073741824
        %v537 = vsel %vm535, %v409, 1073741824
        %v538 = vand.u32 %v536, 65535
        %v539 = vshra.s32 %v536, 16
        %v540 = vcvt.s32.f32 %v538
        %v541 = vcvt.s32.f32 %v539
        %542 = vmin.xlane.f32.xlu0 %v541
        %v543 = vpop.xlane.xlu0 %542
        %vm544 = vcmp.eq.f32.partialorder %v541, %v543
        %v545 = vsel %vm544, %v540, inf
        %546 = vmin.xlane.f32.xlu0 %v545
        %v547 = vpop.xlane.xlu0 %546
        %v548 = vcvt.f32.s32 %v547
        %v549 = vcvt.f32.s32 %v543
        %v550 = vshll.u32 %v549, 16
        %v551 = vadd.s32 %v550, %v548
        %v552 = vand.u32 %v537, 65535
        %v553 = vshra.s32 %v537, 16
        %v554 = vcvt.s32.f32 %v552
        %v555 = vcvt.s32.f32 %v553
        %556 = vmin.xlane.f32.xlu0 %v555
        %v557 = vpop.xlane.xlu0 %556
        %vm558 = vcmp.eq.f32.partialorder %v555, %v557
        %v559 = vsel %vm558, %v554, inf
        %560 = vmin.xlane.f32.xlu0 %v559
        %v561 = vpop.xlane.xlu0 %560
        %v562 = vcvt.f32.s32 %v561
        %v563 = vcvt.f32.s32 %v557
        %v564 = vshll.u32 %v563, 16
        %v565 = vadd.s32 %v564, %v562
        %v566 = vld [vmem:[#allocation5] sm:$0xff]
        %v567 = vld [vmem:[#allocation5 + $0x8] sm:$0xff]
        %vm568 = vcmp.gt.f32.partialorder %v482, %v566
        %vm569 = vcmp.gt.f32.partialorder %v484, %v567
        %v570 = vadd.s32 %v551, %v411
        %v571 = vadd.s32 %v565, %v411
        %v572 = vld [vmem:[#allocation6] sm:$0xff]
        %v573 = vld [vmem:[#allocation6 + $0x8] sm:$0xff]
        %v574 = vsel %vm568, %v570, %v572
        %v575 = vsel %vm569, %v571, %v573
        %576 = vst.msk [vmem:[#allocation6] sm:$0xff] %vm521, %v574
        %577 = vst.msk [vmem:[#allocation6 + $0x8] sm:$0xff] %vm521, %v575
        %v578 = vld [vmem:[#allocation5] sm:$0xff]
        %v579 = vld [vmem:[#allocation5 + $0x8] sm:$0xff]
        %v580 = vmax.f32 %v578, %v482
        %v581 = vmax.f32 %v579, %v484
        %582 = vst.msk [vmem:[#allocation5] sm:$0xff] %vm521, %v580
        %583 = vst.msk [vmem:[#allocation5 + $0x8] sm:$0xff] %vm521, %v581
        %p584 = scmp.eq.s32.totalorder %s21, 2
        // Predicated region
        $region78: #{aam_softmax_loss.1} parent=68 // pred_check
          %p585 = pneg %p584
        $region79: #{aam_softmax_loss.1} parent=68 // pred_check_branch
          %587 = sbr.rel (%p585) target = $region81
        $region80: #{aam_softmax_loss.1} parent=68 // pred_region
          %v588 = vld [vmem:[#allocation2] sm:$0xff]
          %v589 = vld [vmem:[#allocation2 + $0x8] sm:$0xff]
          %v590 = vld [vmem:[#allocation3] sm:$0xff]
          %v591 = vld [vmem:[#allocation3 + $0x8] sm:$0xff]
          %v592 = vlog2.pop %v590
          %v593 = vmul.f32 %v592, 0.6931472
          %v594 = vlog2.pop %v591
          %v595 = vmul.f32 %v594, 0.6931472
          %v596 = vadd.f32 %v588, %v593
          %v597 = vadd.f32 %v589, %v595
          %v598 = vld [vmem:[#allocation4] sm:$0xff]
          %v599 = vld [vmem:[#allocation4 + $0x8] sm:$0xff]
          %v600 = vsub.f32 %v596, %v598
          %v601 = vsub.f32 %v597, %v599
          %602 = vst.msk [vmem:[%s314] sm:$0xff] %vm521, %v600
          %603 = vst.msk [vmem:[%s314 + $0x8] sm:$0xff] %vm521, %v601
          %v604 = vld [vmem:[#allocation6] sm:$0xff]
          %v605 = vld [vmem:[#allocation6 + $0x8] sm:$0xff]
          %vm606 = vcmp.eq.s32.totalorder %v604, %v323
          %vm607 = vcmp.eq.s32.totalorder %v605, %v324
          %v608 = vsel %vm606, 1, 0
          %v609 = vsel %vm607, 1, 0
          %v610 = vcvt.s32.f32 %v608
          %v611 = vcvt.s32.f32 %v609
          %612 = vst.msk [vmem:[%s320] sm:$0xff] %vm521, %v610
          %613 = vst.msk [vmem:[%s320 + $0x8] sm:$0xff] %vm521, %v611
        $region81: #{aam_softmax_loss.1} parent=68 // pred_fallthru
          _
        %s614 = smul.u32 2, %s20
        %p615 = scmp.lt.s32.totalorder %s614, 3
        %s616 = scalar_select %p615, %s614, 3
        %s617 = smul.addr %s616, 8
        %s618 = scalar_lea.vmem %s3, %s617
        %s619 = smul.u32 2, %s20
        %p620 = scmp.lt.s32.totalorder %s619, 3
        %s621 = scalar_select %p620, %s619, 3
        %s622 = smul.addr %s621, 8
        %s623 = scalar_lea.vmem %s4, %s622
        // Predicated region
        $region82: #{aam_softmax_loss.1} parent=68 // pred_check
          %p624 = pneg %p124
        $region83: #{aam_softmax_loss.1} parent=68 // pred_check_branch
          %626 = sbr.rel (%p624) target = $region85
        $region84: #{aam_softmax_loss.1} parent=68 // pred_region
          %s627 = smul.u32 2, %s20
        $region85: #{aam_softmax_loss.1} parent=68 // pred_fallthru
          _
        // Predicated region
        $region86: #{aam_softmax_loss.1} parent=68 // pred_check
          %p628 = pneg %p150
        $region87: #{aam_softmax_loss.1} parent=68 // pred_check_branch
          %630 = sbr.rel (%p628) target = $region89
        $region88: #{aam_softmax_loss.1} parent=68 // pred_region
          %s631 = smul.u32 2, %s20
        $region89: #{aam_softmax_loss.1} parent=68 // pred_fallthru
          _
      $region69: #{aam_softmax_loss.1} parent=5 // pred_fallthru
        _
      %p632 = scmp.le.s32.totalorder 2, %s11
      // Predicated region
      $region90: #{aam_softmax_loss.1} parent=5 // pred_check
        %p633 = pneg %p632
      $region91: #{aam_softmax_loss.1} parent=5 // pred_check_branch
        %635 = sbr.rel (%p633) target = $region93
      $region92: #{aam_softmax_loss.1} parent=5 // pred_region
        %s636 = ssub.s32 %s11, 2
        // Predicated region
        $region94: #{aam_softmax_loss.1} parent=92 // pred_check
          %p637 = pneg %p130
        $region95: #{aam_softmax_loss.1} parent=92 // pred_check_branch
          %639 = sbr.rel (%p637) target = $region97
        $region96: #{aam_softmax_loss.1} parent=92 // pred_region
          %s640 = smul.u32 2, %s22
          %p641 = scmp.lt.s32.totalorder %s640, 3
          %s642 = scalar_select %p641, %s640, 3
          %s643 = smul.addr %s642, 8
          %s644 = scalar_lea.vmem %s3, %s643
        $region97: #{aam_softmax_loss.1} parent=92 // pred_fallthru
          _
        // Predicated region
        $region98: #{aam_softmax_loss.1} parent=92 // pred_check
          %p645 = pneg %p156
        $region99: #{aam_softmax_loss.1} parent=92 // pred_check_branch
          %647 = sbr.rel (%p645) target = $region101
        $region100: #{aam_softmax_loss.1} parent=92 // pred_region
          %s648 = smul.u32 2, %s22
          %p649 = scmp.lt.s32.totalorder %s648, 3
          %s650 = scalar_select %p649, %s648, 3
          %s651 = smul.addr %s650, 8
          %s652 = scalar_lea.vmem %s4, %s651
        $region101: #{aam_softmax_loss.1} parent=92 // pred_fallthru
          _
      $region93: #{aam_softmax_loss.1} parent=5 // pred_fallthru
        _
    $region6: #{aam_softmax_loss.1} parent=1 // loop_footer
      %s15 = sadd.s32 1, %s11
    $region7: #{aam_softmax_loss.1} parent=1 // loop_footer_branch
      %10 = sbr.rel target = $region3
    $region8: #{aam_softmax_loss.1} parent=1 // loop_exit
      _

</llo_original>
